<compile_context>
chip_gen: v7x
topology: tpu7x:2x2x1
jax: 0.10.0
libtpu: 0.0.40
codegen_flags: <defaults>
</compile_context>

<pallas_src>
import functools
import math

import jax
import jax.numpy as jnp
from jax.experimental import pallas as pl
from jax.experimental.pallas import tpu as pltpu


def _round_up(x, m):
    return (x + m - 1) // m * m


def _snn_seq_kernel(x_ref, w_ref, mp_ref, spike_ref, mp_out_ref, *,
                    decay, threshold, reset, t_real, t_blk, guard_tail):
    # x_ref:      (t_blk, K)      weight_dtype
    # w_ref:      (K, tile_n)     weight_dtype, pre-transposed (MXU-native RHS)
    # mp_ref:     (1, tile_n)     f32 state (read only at t==0)
    # spike_ref:  (t_blk, tile_n) f32 output block (reused as the isyn buffer)
    # mp_out_ref: (1, tile_n)     f32, resident across the time grid axis
    t_idx = pl.program_id(1)

    @pl.when(t_idx == 0)
    def _():
        mp_out_ref[...] = mp_ref[...]

    # Synaptic currents for every timestep of this (neuron tile, time block) in
    # one MXU matmul, written directly into the spike output block.
    spike_ref[...] = jnp.dot(x_ref[...], w_ref[...],
                             preferred_element_type=jnp.float32)

    num_chunks = t_blk // 8
    reset_f = jnp.float32(reset)

    def chunk(c, mp):
        base = pl.multiple_of(c * 8, 8)
        slab = spike_ref[pl.ds(base, 8), :]          # (8, tile_n) isyn rows
        rows = []
        for r in range(8):                           # static unroll: ILP + slab store
            mp_new = decay * mp + slab[r:r + 1, :]
            fired = mp_new >= threshold
            spk = fired.astype(jnp.float32)
            mp_next = jnp.where(fired, reset_f, mp_new)
            if guard_tail:
                # Only emitted when T was padded to a multiple of t_blk: padded
                # steps must not touch mp (their spike rows are sliced off).
                in_range = (t_idx * t_blk + base + r) < t_real
                spk = jnp.where(in_range, spk, jnp.zeros_like(spk))
                mp_next = jnp.where(in_range, mp_next, mp)
            rows.append(spk)
            mp = mp_next
        # One lane/sublane-dense (8, tile_n) store instead of 8 single-row stores.
        spike_ref[pl.ds(base, 8), :] = jnp.concatenate(rows, axis=0)
        return mp

    unroll = True if num_chunks <= 4 else 2
    mp_final = jax.lax.fori_loop(0, num_chunks, chunk, mp_out_ref[...],
                                 unroll=unroll)
    mp_out_ref[...] = mp_final


@functools.partial(
    jax.jit,
    static_argnames=("tau_mem", "threshold", "reset", "tile_n", "t_block",
                     "weight_dtype"))
def spiking_neuron_forward_sequence(x_seq, synaptic_weight, membrane_potential,
                                    *, tau_mem=10.0, threshold=1.0, reset=0.0,
                                    tile_n=512, t_block=None,
                                    weight_dtype=jnp.float32):
    """Run T forward steps of SpikingNeuronLayer with one Pallas kernel.

    Args:
      x_seq: (T, num_inputs) — T input vectors (one per forward() call).
      synaptic_weight: (num_neurons, num_inputs), native PyTorch layout.
      membrane_potential: (num_neurons,) f32 state.

    Returns:
      spikes: (T, num_neurons) f32
      new_membrane_potential: (num_neurons,) f32
    """
    T, K = x_seq.shape
    N, K2 = synaptic_weight.shape
    assert K == K2, "x feature dim must match synaptic_weight's num_inputs"

    decay = math.exp(-1.0 / float(tau_mem))   # host-side constant, no device sync
    itemsize = jnp.dtype(weight_dtype).itemsize

    # ---------------- tile selection (re-derived to fit VMEM) ----------------
    n128 = _round_up(N, 128)
    tn = max(128, min(_round_up(int(tile_n), 128), n128))
    if n128 >= 256:
        # Prefer >= 2 neuron tiles: shards the "parallel" axis across v7x's two
        # TensorCores and gives the W DMA something to pipeline against.
        tn = min(tn, max(128, (n128 // 2) // 128 * 128))

    tb = _round_up(T, 8) if t_block is None else _round_up(int(t_block), 8)
    tb = max(8, min(tb, 256, _round_up(T, 8)))

    try:
        vmem_cap = int(pltpu.get_tpu_info().vmem_capacity_bytes)
    except Exception:
        vmem_cap = 64 << 20                    # conservative (v7x per-TC VMEM)
    budget = (vmem_cap * 3) // 4               # ~48 MiB on v7x, ~96 MiB on v5e/v6e

    def _vmem_est(tn_, tb_):
        return (2 * K * tn_ * itemsize         # double-buffered W tile
                + 2 * tb_ * K * itemsize       # x blocks
                + 2 * tb_ * tn_ * 4            # spike output blocks (f32)
                + 8 * tn_ * 4                  # mp in/out blocks
                + (2 << 20))                   # Mosaic internal-scratch slack

    while _vmem_est(tn, tb) > budget and (tb > 8 or tn > 128):
        if tb > 8:
            tb = max(8, _round_up(tb // 2, 8))
        else:
            tn = max(128, (tn // 2) // 128 * 128)

    n_pad = _round_up(N, tn)
    t_pad = _round_up(T, tb)
    n_tiles = n_pad // tn
    t_tiles = t_pad // tb

    # ---------------- operand preparation (one relayout, fused by XLA) -------
    w = synaptic_weight.astype(weight_dtype)
    if n_pad != N:
        w = jnp.pad(w, ((0, n_pad - N), (0, 0)))
    w_t = w.T                                   # (K, n_pad): MXU-native RHS layout

    x = x_seq.astype(weight_dtype)
    if t_pad != T:
        x = jnp.pad(x, ((0, t_pad - T), (0, 0)))

    mp = membrane_potential.reshape(1, N).astype(jnp.float32)
    if n_pad != N:
        mp = jnp.pad(mp, ((0, 0), (0, n_pad - N)))

    kernel = functools.partial(
        _snn_seq_kernel, decay=decay, threshold=float(threshold),
        reset=float(reset), t_real=T, t_blk=tb, guard_tail=(t_pad != T))

    spikes, mp_new = pl.pallas_call(
        kernel,
        out_shape=(
            jax.ShapeDtypeStruct((t_pad, n_pad), jnp.float32),
            jax.ShapeDtypeStruct((1, n_pad), jnp.float32),
        ),
        grid_spec=pltpu.PrefetchScalarGridSpec(
            num_scalar_prefetch=0,
            grid=(n_tiles, t_tiles),            # time axis innermost (mp carry)
            in_specs=[
                pl.BlockSpec((tb, K), lambda j, t: (t, 0)),     # x: streamed
                pl.BlockSpec((K, tn), lambda j, t: (0, j)),     # W^T: per-tile
                pl.BlockSpec((1, tn), lambda j, t: (0, j)),     # mp state tile
            ],
            out_specs=(
                pl.BlockSpec((tb, tn), lambda j, t: (t, j)),    # spikes
                pl.BlockSpec((1, tn), lambda j, t: (0, j)),     # new mp (resident)
            ),
        ),
        input_output_aliases={2: 1},            # mp updated in place
        compiler_params=pltpu.CompilerParams(
            dimension_semantics=("parallel", "arbitrary"),
            vmem_limit_bytes=int(budget)),
    )(x, w_t, mp)

    return spikes[:T, :N], mp_new[0, :N]


def spiking_neuron_forward(x, synaptic_weight, membrane_potential,
                           *, tau_mem=10.0, threshold=1.0, reset=0.0,
                           weight_dtype=jnp.float32):
    """Module-equivalent single forward step. x: (num_inputs, 1) column vector.

    Prefer batching timesteps into spiking_neuron_forward_sequence: the T=1
    path re-streams all of W per call and runs an M=1 GEMV on the MXU.
    """
    num_inputs = synaptic_weight.shape[1]
    x_row = jnp.asarray(x).reshape(1, num_inputs)
    spikes, mp_new = spiking_neuron_forward_sequence(
        x_row, synaptic_weight, membrane_potential,
        tau_mem=tau_mem, threshold=threshold, reset=reset,
        weight_dtype=weight_dtype)
    return spikes[0], mp_new


if __name__ == "__main__":
    tau_mem, threshold, reset = 10.0, 1.0, 0.0

    def reference(x_seq, w, mp0):
        dec = math.exp(-1.0 / tau_mem)
        isyn = jnp.dot(x_seq, w.T, preferred_element_type=jnp.float32)
        mp = mp0
        spikes, mp_pre = [], []
        for t in range(x_seq.shape[0]):
            mp = dec * mp + isyn[t]
            mp_pre.append(mp)
            fired = mp >= threshold
            spikes.append(fired.astype(jnp.float32))
            mp = jnp.where(fired, reset, mp)
        return jnp.stack(spikes), mp, jnp.stack(mp_pre)

    def check(name, T, N, K, seed):
        key = jax.random.PRNGKey(seed)
        kw, kx, km = jax.random.split(key, 3)
        w = jax.random.normal(kw, (N, K), jnp.float32) * 0.3
        x = jax.random.normal(kx, (T, K), jnp.float32)
        mp0 = jax.random.normal(km, (N,), jnp.float32) * 0.1

        spikes, mp_new = spiking_neuron_forward_sequence(
            x, w, mp0, tau_mem=tau_mem, threshold=threshold, reset=reset)
        spikes = jax.block_until_ready(spikes)
        mp_new = jax.block_until_ready(mp_new)
        assert spikes.shape == (T, N) and mp_new.shape == (N,), name

        ref_spikes, ref_mp, ref_mp_pre = reference(x, w, mp0)
        # Spike decisions may legitimately differ only where mp sits numerically
        # on the threshold (matmul accumulation-order rounding).
        near = jnp.abs(ref_mp_pre - threshold) < 1e-2
        assert bool(jnp.all((spikes == ref_spikes) | near)), f"{name}: spike mismatch"
        safe = ~jnp.any(near, axis=0)
        assert bool(jnp.all(jnp.where(safe, jnp.abs(mp_new - ref_mp) < 1e-2, True))), \
            f"{name}: membrane potential mismatch"
        return ref_spikes, near, w, x, mp0

    # Case 1: small canonical shapes (N multiple of 128, T multiple of 8).
    ref_spikes, near, w, x, mp0 = check("case1", T=8, N=256, K=128, seed=0)

    # Case 2: ragged shapes exercising the N-pad and time-tail guard paths.
    check("case2", T=11, N=192, K=96, seed=1)

    # Module-equivalent single-step API sanity check (x as a (K, 1) column).
    spike1, mp1 = spiking_neuron_forward(
        x[0].reshape(-1, 1), w, mp0,
        tau_mem=tau_mem, threshold=threshold, reset=reset)
    spike1 = jax.block_until_ready(spike1)
    assert bool(jnp.all((spike1 == ref_spikes[0]) | near[0])), \
        "single-step spike mismatch"

    print("KERNEL_OK")
</pallas_src>

<mosaic_0001>
module attributes {stable_mosaic.version = 11 : i64} {
  func.func @_snn_seq_kernel(%arg0: i32, %arg1: i32, %arg2: memref<8x128xf32, #tpu.memory_space<vmem>>, %arg3: memref<128x128xf32, #tpu.memory_space<vmem>>, %arg4: memref<1x128xf32, #tpu.memory_space<vmem>>, %arg5: memref<8x128xf32, #tpu.memory_space<vmem>>, %arg6: memref<1x128xf32, #tpu.memory_space<vmem>>) attributes {dimension_semantics = [#tpu.dimension_semantics<parallel>, #tpu.dimension_semantics<arbitrary>], iteration_bounds = array<i64: 2, 1>, scalar_prefetch = 0 : i64, scratch_operands = 0 : i64, tpu.core_type = #tpu.core_type<tc>, window_params = [{transform_indices = @transform_0, window_bounds = array<i64: 8, 128>}, {transform_indices = @transform_1, window_bounds = array<i64: 128, 128>}, {transform_indices = @transform_2, window_bounds = array<i64: 1, 128>}, {transform_indices = @transform_3, window_bounds = array<i64: 8, 128>}, {transform_indices = @transform_4, window_bounds = array<i64: 1, 128>}]} {
    %c0_i32 = arith.constant 0 : i32
    %0 = arith.cmpi eq, %arg1, %c0_i32 : i32
    %1 = arith.extui %0 : i1 to i32
    %c0_i32_0 = arith.constant 0 : i32
    %2 = arith.cmpi ne, %1, %c0_i32_0 : i32
    scf.if %2 {
      %c0_30 = arith.constant 0 : index
      %c0_31 = arith.constant 0 : index
      %96 = vector.load %arg4[%c0_30, %c0_31] : memref<1x128xf32, #tpu.memory_space<vmem>>, vector<1x128xf32>
      %c0_32 = arith.constant 0 : index
      %c0_33 = arith.constant 0 : index
      %97 = vector.load %arg6[%c0_32, %c0_33] : memref<1x128xf32, #tpu.memory_space<vmem>>, vector<1x128xf32>
      tpu.vector_store %arg6[%c0_32, %c0_33], %96 {strides = array<i32>} : memref<1x128xf32, #tpu.memory_space<vmem>>, vector<1x128xf32>,
    } else {
    }
    %c0 = arith.constant 0 : index
    %c0_1 = arith.constant 0 : index
    %3 = vector.load %arg2[%c0, %c0_1] : memref<8x128xf32, #tpu.memory_space<vmem>>, vector<8x128xf32>
    %c0_2 = arith.constant 0 : index
    %c0_3 = arith.constant 0 : index
    %4 = vector.load %arg3[%c0_2, %c0_3] : memref<128x128xf32, #tpu.memory_space<vmem>>, vector<128x128xf32>
    %cst = arith.constant dense<0.000000e+00> : vector<8x128xf32>
    %5 = tpu.matmul %3, %4, %cst {dimension_numbers = #tpu.dot_dimension_numbers<[1], [0], [0], [1], [0, 0, 1, 1], [], []>} : vector<8x128xf32>, vector<128x128xf32>, vector<8x128xf32> -> vector<8x128xf32>
    %c0_4 = arith.constant 0 : index
    %c0_5 = arith.constant 0 : index
    %6 = vector.load %arg5[%c0_4, %c0_5] : memref<8x128xf32, #tpu.memory_space<vmem>>, vector<8x128xf32>
    tpu.vector_store %arg5[%c0_4, %c0_5], %5 {strides = array<i32>} : memref<8x128xf32, #tpu.memory_space<vmem>>, vector<8x128xf32>,
    %c0_6 = arith.constant 0 : index
    %c0_7 = arith.constant 0 : index
    %7 = vector.load %arg6[%c0_6, %c0_7] : memref<1x128xf32, #tpu.memory_space<vmem>>, vector<1x128xf32>
    %cst_8 = arith.constant 0.000000e+00 : f32
    %c0_i32_9 = arith.constant 0 : i32
    %c8_i32 = arith.constant 8 : i32
    %8 = arith.muli %c0_i32_9, %c8_i32 : i32
    %9 = tpu.assume_multiple %8, 8 : i32
    %10 = arith.index_cast %9 : i32 to index
    %c0_10 = arith.constant 0 : index
    %11 = vector.load %arg5[%10, %c0_10] : memref<8x128xf32, #tpu.memory_space<vmem>>, vector<8x128xf32>
    %cst_11 = arith.constant 0.904837429 : f32
    %12 = vector.broadcast %cst_11 : f32 to vector<1x128xf32>
    %13 = arith.mulf %12, %7 : vector<1x128xf32>
    %14 = vector.extract_strided_slice %11 {offsets = [0, 0], sizes = [1, 128], strides = [1, 1]} : vector<8x128xf32> to vector<1x128xf32>
    %15 = arith.addf %13, %14 : vector<1x128xf32>
    %cst_12 = arith.constant 1.000000e+00 : f32
    %16 = vector.broadcast %cst_12 : f32 to vector<1x128xf32>
    %17 = arith.cmpf oge, %15, %16 : vector<1x128xf32>
    %18 = arith.extui %17 : vector<1x128xi1> to vector<1x128xi32>
    %19 = arith.sitofp %18 : vector<1x128xi32> to vector<1x128xf32>
    %20 = vector.broadcast %cst_8 : f32 to vector<1x128xf32>
    %21 = arith.select %17, %20, %15 : vector<1x128xi1>, vector<1x128xf32>
    %cst_13 = arith.constant 0.904837429 : f32
    %22 = vector.broadcast %cst_13 : f32 to vector<1x128xf32>
    %23 = arith.mulf %22, %21 : vector<1x128xf32>
    %24 = vector.extract_strided_slice %11 {offsets = [1, 0], sizes = [1, 128], strides = [1, 1]} : vector<8x128xf32> to vector<1x128xf32>
    %25 = arith.addf %23, %24 : vector<1x128xf32>
    %cst_14 = arith.constant 1.000000e+00 : f32
    %26 = vector.broadcast %cst_14 : f32 to vector<1x128xf32>
    %27 = arith.cmpf oge, %25, %26 : vector<1x128xf32>
    %28 = arith.extui %27 : vector<1x128xi1> to vector<1x128xi32>
    %29 = arith.sitofp %28 : vector<1x128xi32> to vector<1x128xf32>
    %30 = vector.broadcast %cst_8 : f32 to vector<1x128xf32>
    %31 = arith.select %27, %30, %25 : vector<1x128xi1>, vector<1x128xf32>
    %cst_15 = arith.constant 0.904837429 : f32
    %32 = vector.broadcast %cst_15 : f32 to vector<1x128xf32>
    %33 = arith.mulf %32, %31 : vector<1x128xf32>
    %34 = vector.extract_strided_slice %11 {offsets = [2, 0], sizes = [1, 128], strides = [1, 1]} : vector<8x128xf32> to vector<1x128xf32>
    %35 = arith.addf %33, %34 : vector<1x128xf32>
    %cst_16 = arith.constant 1.000000e+00 : f32
    %36 = vector.broadcast %cst_16 : f32 to vector<1x128xf32>
    %37 = arith.cmpf oge, %35, %36 : vector<1x128xf32>
    %38 = arith.extui %37 : vector<1x128xi1> to vector<1x128xi32>
    %39 = arith.sitofp %38 : vector<1x128xi32> to vector<1x128xf32>
    %40 = vector.broadcast %cst_8 : f32 to vector<1x128xf32>
    %41 = arith.select %37, %40, %35 : vector<1x128xi1>, vector<1x128xf32>
    %cst_17 = arith.constant 0.904837429 : f32
    %42 = vector.broadcast %cst_17 : f32 to vector<1x128xf32>
    %43 = arith.mulf %42, %41 : vector<1x128xf32>
    %44 = vector.extract_strided_slice %11 {offsets = [3, 0], sizes = [1, 128], strides = [1, 1]} : vector<8x128xf32> to vector<1x128xf32>
    %45 = arith.addf %43, %44 : vector<1x128xf32>
    %cst_18 = arith.constant 1.000000e+00 : f32
    %46 = vector.broadcast %cst_18 : f32 to vector<1x128xf32>
    %47 = arith.cmpf oge, %45, %46 : vector<1x128xf32>
    %48 = arith.extui %47 : vector<1x128xi1> to vector<1x128xi32>
    %49 = arith.sitofp %48 : vector<1x128xi32> to vector<1x128xf32>
    %50 = vector.broadcast %cst_8 : f32 to vector<1x128xf32>
    %51 = arith.select %47, %50, %45 : vector<1x128xi1>, vector<1x128xf32>
    %cst_19 = arith.constant 0.904837429 : f32
    %52 = vector.broadcast %cst_19 : f32 to vector<1x128xf32>
    %53 = arith.mulf %52, %51 : vector<1x128xf32>
    %54 = vector.extract_strided_slice %11 {offsets = [4, 0], sizes = [1, 128], strides = [1, 1]} : vector<8x128xf32> to vector<1x128xf32>
    %55 = arith.addf %53, %54 : vector<1x128xf32>
    %cst_20 = arith.constant 1.000000e+00 : f32
    %56 = vector.broadcast %cst_20 : f32 to vector<1x128xf32>
    %57 = arith.cmpf oge, %55, %56 : vector<1x128xf32>
    %58 = arith.extui %57 : vector<1x128xi1> to vector<1x128xi32>
    %59 = arith.sitofp %58 : vector<1x128xi32> to vector<1x128xf32>
    %60 = vector.broadcast %cst_8 : f32 to vector<1x128xf32>
    %61 = arith.select %57, %60, %55 : vector<1x128xi1>, vector<1x128xf32>
    %cst_21 = arith.constant 0.904837429 : f32
    %62 = vector.broadcast %cst_21 : f32 to vector<1x128xf32>
    %63 = arith.mulf %62, %61 : vector<1x128xf32>
    %64 = vector.extract_strided_slice %11 {offsets = [5, 0], sizes = [1, 128], strides = [1, 1]} : vector<8x128xf32> to vector<1x128xf32>
    %65 = arith.addf %63, %64 : vector<1x128xf32>
    %cst_22 = arith.constant 1.000000e+00 : f32
    %66 = vector.broadcast %cst_22 : f32 to vector<1x128xf32>
    %67 = arith.cmpf oge, %65, %66 : vector<1x128xf32>
    %68 = arith.extui %67 : vector<1x128xi1> to vector<1x128xi32>
    %69 = arith.sitofp %68 : vector<1x128xi32> to vector<1x128xf32>
    %70 = vector.broadcast %cst_8 : f32 to vector<1x128xf32>
    %71 = arith.select %67, %70, %65 : vector<1x128xi1>, vector<1x128xf32>
    %cst_23 = arith.constant 0.904837429 : f32
    %72 = vector.broadcast %cst_23 : f32 to vector<1x128xf32>
    %73 = arith.mulf %72, %71 : vector<1x128xf32>
    %74 = vector.extract_strided_slice %11 {offsets = [6, 0], sizes = [1, 128], strides = [1, 1]} : vector<8x128xf32> to vector<1x128xf32>
    %75 = arith.addf %73, %74 : vector<1x128xf32>
    %cst_24 = arith.constant 1.000000e+00 : f32
    %76 = vector.broadcast %cst_24 : f32 to vector<1x128xf32>
    %77 = arith.cmpf oge, %75, %76 : vector<1x128xf32>
    %78 = arith.extui %77 : vector<1x128xi1> to vector<1x128xi32>
    %79 = arith.sitofp %78 : vector<1x128xi32> to vector<1x128xf32>
    %80 = vector.broadcast %cst_8 : f32 to vector<1x128xf32>
    %81 = arith.select %77, %80, %75 : vector<1x128xi1>, vector<1x128xf32>
    %cst_25 = arith.constant 0.904837429 : f32
    %82 = vector.broadcast %cst_25 : f32 to vector<1x128xf32>
    %83 = arith.mulf %82, %81 : vector<1x128xf32>
    %84 = vector.extract_strided_slice %11 {offsets = [7, 0], sizes = [1, 128], strides = [1, 1]} : vector<8x128xf32> to vector<1x128xf32>
    %85 = arith.addf %83, %84 : vector<1x128xf32>
    %cst_26 = arith.constant 1.000000e+00 : f32
    %86 = vector.broadcast %cst_26 : f32 to vector<1x128xf32>
    %87 = arith.cmpf oge, %85, %86 : vector<1x128xf32>
    %88 = arith.extui %87 : vector<1x128xi1> to vector<1x128xi32>
    %89 = arith.sitofp %88 : vector<1x128xi32> to vector<1x128xf32>
    %90 = vector.broadcast %cst_8 : f32 to vector<1x128xf32>
    %91 = arith.select %87, %90, %85 : vector<1x128xi1>, vector<1x128xf32>
    %92 = tpu.concatenate %19, %29, %39, %49, %59, %69, %79, %89 in 0 : vector<1x128xf32>, vector<1x128xf32>, vector<1x128xf32>, vector<1x128xf32>, vector<1x128xf32>, vector<1x128xf32>, vector<1x128xf32>, vector<1x128xf32> -> vector<8x128xf32>
    %93 = arith.index_cast %9 : i32 to index
    %c0_27 = arith.constant 0 : index
    %94 = vector.load %arg5[%93, %c0_27] : memref<8x128xf32, #tpu.memory_space<vmem>>, vector<8x128xf32>
    tpu.vector_store %arg5[%93, %c0_27], %92 {strides = array<i32>} : memref<8x128xf32, #tpu.memory_space<vmem>>, vector<8x128xf32>,
    %c1_i32 = arith.constant 1 : i32
    %c0_28 = arith.constant 0 : index
    %c0_29 = arith.constant 0 : index
    %95 = vector.load %arg6[%c0_28, %c0_29] : memref<1x128xf32, #tpu.memory_space<vmem>>, vector<1x128xf32>
    tpu.vector_store %arg6[%c0_28, %c0_29], %91 {strides = array<i32>} : memref<1x128xf32, #tpu.memory_space<vmem>>, vector<1x128xf32>,
    return
  }
  func.func @transform_0(%arg0: i32, %arg1: i32) -> (i32, i32) {
    %c0_i32 = arith.constant 0 : i32
    %c0_i32_0 = arith.constant 0 : i32
    return %arg1, %c0_i32 : i32, i32
  }
  func.func @transform_1(%arg0: i32, %arg1: i32) -> (i32, i32) {
    %c0_i32 = arith.constant 0 : i32
    %c0_i32_0 = arith.constant 0 : i32
    return %c0_i32, %arg0 : i32, i32
  }
  func.func @transform_2(%arg0: i32, %arg1: i32) -> (i32, i32) {
    %c0_i32 = arith.constant 0 : i32
    %c0_i32_0 = arith.constant 0 : i32
    return %c0_i32, %arg0 : i32, i32
  }
  func.func @transform_3(%arg0: i32, %arg1: i32) -> (i32, i32) {
    %c0_i32 = arith.constant 0 : i32
    return %arg1, %arg0 : i32, i32
  }
  func.func @transform_4(%arg0: i32, %arg1: i32) -> (i32, i32) {
    %c0_i32 = arith.constant 0 : i32
    %c0_i32_0 = arith.constant 0 : i32
    return %c0_i32, %arg0 : i32, i32
  }
}

</mosaic_0001>

<llo_original>
// kernel: spiking_neuron_forward_sequence.1
$region0: #{spiking_neuron_forward_sequence.1}
  #allocation0 [shape = 'u32[]', space=smem, size = 0x4, offset = 0x4, fixed_abs, tag = 'smem constant byte address 0x4 - core index']
  #allocation1 [shape = 'u32[144,128]{1,0:T(1,128)}', space=vmem, size = 0x12000, scoped, tag = 'internal scratch']
  %s0 = inlined_call_operand.vmem [shape: f32[8,128], index: 0, kind: input, shape index: {}]
  %s1 = inlined_call_operand.vmem [shape: f32[128,256], index: 1, kind: input, shape index: {}]
  %s2 = inlined_call_operand.vmem [shape: f32[1,256], index: 2, kind: input, shape index: {}, may-alias: {2,4}]
  %s3 = inlined_call_operand.hbm [shape: f32[8,256], index: 3, kind: output, shape index: {0}]
  %s4 = inlined_call_operand.vmem [shape: f32[1,256], index: 4, kind: output, shape index: {1}, may-alias: {2,4}]
  %5 = xla_tuple %s3, %s4
  %s6 = sld [smem:[#allocation0]]
  $region95: #{spiking_neuron_forward_sequence.1} parent=0
    _
  %s8 = ssub.s32 1, %s6
  %s9 = scalar_select 0, %s8, %s6
  $region1: #{spiking_neuron_forward_sequence.1} parent=0
    #allocation2 [shape = 'u8[131072]{0}', space=vmem, size = 0x20000, scoped, tag = 'input window, operand 1']
    #allocation3 [shape = 'u8[8192]{0}', space=vmem, size = 0x2000, scoped, tag = 'output window, operand 0']
    #allocation4 [shape = 's32[2]{0}', space=sflag, size = 0x8, scoped, tag = 'scoped memory for spiking_neuron_forward_sequence.1']
    %10 = vsyncpa [#allocation4], 0
    %s11 = scalar_lea.sflag [#allocation4], 1
    %12 = vsyncpa %s11, 0
    loop: start=0, step=1, limit=4
    $region2: #{spiking_neuron_forward_sequence.1} parent=1 // loop_pre_header
      _
    $region3: #{spiking_neuron_forward_sequence.1} parent=1 // loop_header
      %s14 = sphi 0, %s18
      %p15 = scmp.ge.s32.totalorder %s14, 4
      %s21 = sphi 0, %s33
      %s22 = sphi 0, %s29
      %s23 = sphi 0, %s21
      %s24 = sphi 0, %s22
      %s25 = sphi 0, %s23
      %s26 = sphi 0, %s24
      %s36 = sphi 0, %s38
      %s39 = sphi 0, %s36
      %s40 = sphi 0, %s39
      %s56 = sphi 0, %s40
      %s62 = sphi 0, %s64
      %s65 = sphi 0, %s62
      %s66 = sphi 0, %s65
      %s82 = sphi 0, %s66
      %s88 = sphi 0, %s90
      %s91 = sphi 0, %s88
      %s92 = sphi 0, %s91
      %s108 = sphi 0, %s92
      %s116 = sphi 0, %s118
      %s119 = sphi 0, %s116
      %s120 = sphi 0, %s119
      %s136 = sphi 0, %s120
      %s142 = sphi 0, %s144
      %s145 = sphi 0, %s142
      %s146 = sphi 0, %s145
      %s162 = sphi 0, %s146
    $region4: #{spiking_neuron_forward_sequence.1} parent=1 // loop_header_branch
      %17 = sbr.rel (%p15) target = $region8
    $region5: #{spiking_neuron_forward_sequence.1} parent=1 // loop_body
      %s19 = ssub.s32 %s14, 1
      %s20 = ssub.s32 %s14, 2
      %s27 = sadd.s32 1, %s22
      %p28 = scmp.ge.s32.totalorder %s27, 1
      %s29 = scalar_select %p28, 0, %s27
      %s30 = sadd.s32 1, %s21
      %s31 = scalar_select %p28, %s30, %s21
      %p32 = scmp.ge.s32.totalorder %s31, 2
      %s33 = scalar_select %p32, 0, %s31
      %s34 = ssub.s32 %s22, %s29
      %p35 = scmp.eq.s32.totalorder %s34, 0
      %s37 = sadd.s32 %s36, 1
      %s38 = scalar_select %p35, %s36, %s37
      %p41 = pneg %p35
      %p42 = scmp.eq.s32.totalorder %s14, 1
      %p43 = por %p41, %p42
      %p44 = scmp.ne.s32.totalorder %s36, %s39
      %p45 = scmp.eq.s32.totalorder %s14, 0
      %p46 = por %p44, %p45
      %p47 = scmp.ne.s32.totalorder %s36, %s39
      %p48 = scmp.eq.s32.totalorder %s19, 1
      %p49 = por %p47, %p48
      %p50 = scmp.ne.s32.totalorder %s39, %s40
      %p51 = scmp.eq.s32.totalorder %s19, 0
      %p52 = por %p50, %p51
      %p53 = scmp.ne.s32.totalorder %s39, %s40
      %p54 = scmp.eq.s32.totalorder %s20, 1
      %p55 = por %p53, %p54
      %p57 = scmp.ne.s32.totalorder %s40, %s56
      %p58 = scmp.eq.s32.totalorder %s20, 0
      %p59 = por %p57, %p58
      %s60 = ssub.s32 %s21, %s33
      %p61 = scmp.eq.s32.totalorder %s60, 0
      %s63 = sadd.s32 %s62, 1
      %s64 = scalar_select %p61, %s62, %s63
      %p67 = pneg %p61
      %p68 = scmp.eq.s32.totalorder %s14, 1
      %p69 = por %p67, %p68
      %p70 = scmp.ne.s32.totalorder %s62, %s65
      %p71 = scmp.eq.s32.totalorder %s14, 0
      %p72 = por %p70, %p71
      %p73 = scmp.ne.s32.totalorder %s62, %s65
      %p74 = scmp.eq.s32.totalorder %s19, 1
      %p75 = por %p73, %p74
      %p76 = scmp.ne.s32.totalorder %s65, %s66
      %p77 = scmp.eq.s32.totalorder %s19, 0
      %p78 = por %p76, %p77
      %p79 = scmp.ne.s32.totalorder %s65, %s66
      %p80 = scmp.eq.s32.totalorder %s20, 1
      %p81 = por %p79, %p80
      %p83 = scmp.ne.s32.totalorder %s66, %s82
      %p84 = scmp.eq.s32.totalorder %s20, 0
      %p85 = por %p83, %p84
      %s86 = ssub.s32 %s21, %s33
      %p87 = scmp.eq.s32.totalorder %s86, 0
      %s89 = sadd.s32 %s88, 1
      %s90 = scalar_select %p87, %s88, %s89
      %p93 = pneg %p87
      %p94 = scmp.eq.s32.totalorder %s14, 1
      %p95 = por %p93, %p94
      %p96 = scmp.ne.s32.totalorder %s88, %s91
      %p97 = scmp.eq.s32.totalorder %s14, 0
      %p98 = por %p96, %p97
      %p99 = scmp.ne.s32.totalorder %s88, %s91
      %p100 = scmp.eq.s32.totalorder %s19, 1
      %p101 = por %p99, %p100
      %p102 = scmp.ne.s32.totalorder %s91, %s92
      %p103 = scmp.eq.s32.totalorder %s19, 0
      %p104 = por %p102, %p103
      %p105 = scmp.ne.s32.totalorder %s91, %s92
      %p106 = scmp.eq.s32.totalorder %s20, 1
      %p107 = por %p105, %p106
      %p109 = scmp.ne.s32.totalorder %s92, %s108
      %p110 = scmp.eq.s32.totalorder %s20, 0
      %p111 = por %p109, %p110
      %s112 = ssub.s32 %s22, %s29
      %s113 = ssub.s32 %s21, %s33
      %s114 = sor.u32 %s112, %s113
      %p115 = scmp.eq.s32.totalorder %s114, 0
      %s117 = sadd.s32 %s116, 1
      %s118 = scalar_select %p115, %s116, %s117
      %p121 = pneg %p115
      %p122 = scmp.eq.s32.totalorder %s14, 1
      %p123 = por %p121, %p122
      %p124 = scmp.ne.s32.totalorder %s116, %s119
      %p125 = scmp.eq.s32.totalorder %s14, 0
      %p126 = por %p124, %p125
      %p127 = scmp.ne.s32.totalorder %s116, %s119
      %p128 = scmp.eq.s32.totalorder %s19, 1
      %p129 = por %p127, %p128
      %p130 = scmp.ne.s32.totalorder %s119, %s120
      %p131 = scmp.eq.s32.totalorder %s19, 0
      %p132 = por %p130, %p131
      %p133 = scmp.ne.s32.totalorder %s119, %s120
      %p134 = scmp.eq.s32.totalorder %s20, 1
      %p135 = por %p133, %p134
      %p137 = scmp.ne.s32.totalorder %s120, %s136
      %p138 = scmp.eq.s32.totalorder %s20, 0
      %p139 = por %p137, %p138
      %s140 = ssub.s32 %s21, %s33
      %p141 = scmp.eq.s32.totalorder %s140, 0
      %s143 = sadd.s32 %s142, 1
      %s144 = scalar_select %p141, %s142, %s143
      %p147 = pneg %p141
      %p148 = scmp.eq.s32.totalorder %s14, 1
      %p149 = por %p147, %p148
      %p150 = scmp.ne.s32.totalorder %s142, %s145
      %p151 = scmp.eq.s32.totalorder %s14, 0
      %p152 = por %p150, %p151
      %p153 = scmp.ne.s32.totalorder %s142, %s145
      %p154 = scmp.eq.s32.totalorder %s19, 1
      %p155 = por %p153, %p154
      %p156 = scmp.ne.s32.totalorder %s145, %s146
      %p157 = scmp.eq.s32.totalorder %s19, 0
      %p158 = por %p156, %p157
      %p159 = scmp.ne.s32.totalorder %s145, %s146
      %p160 = scmp.eq.s32.totalorder %s20, 1
      %p161 = por %p159, %p160
      %p163 = scmp.ne.s32.totalorder %s146, %s162
      %p164 = scmp.eq.s32.totalorder %s20, 0
      %p165 = por %p163, %p164
      %p166 = scmp.le.s32.totalorder 1, %s14
      %p167 = scmp.lt.s32.totalorder %s14, 3
      %p168 = pnand %p166, %p167
      %p169 = pneg %p168
      // Predicated region
      $region9: #{spiking_neuron_forward_sequence.1} parent=5 // pred_check
        _
      $region10: #{spiking_neuron_forward_sequence.1} parent=5 // pred_check_branch
        %171 = sbr.rel (%p168) target = $region12
      $region11: #{spiking_neuron_forward_sequence.1} parent=5 // pred_region
        %s172 = ssub.s32 %s14, 1
        // Predicated region
        $region13: #{spiking_neuron_forward_sequence.1} parent=11 // pred_check
          %p173 = pneg %p52
        $region14: #{spiking_neuron_forward_sequence.1} parent=11 // pred_check_branch
          %175 = sbr.rel (%p173) target = $region16
        $region15: #{spiking_neuron_forward_sequence.1} parent=11 // pred_region
          %p176 = scmp.lt.s32.totalorder %s24, 0
          %s177 = scalar_select %p176, %s24, 0
          %s178 = smul.addr %s177, 8
          %s179 = scalar_lea.vmem %s0, %s178
        $region16: #{spiking_neuron_forward_sequence.1} parent=11 // pred_fallthru
          _
      $region12: #{spiking_neuron_forward_sequence.1} parent=5 // pred_fallthru
        _
      %p180 = scmp.lt.s32.totalorder %s14, 2
      // Predicated region
      $region17: #{spiking_neuron_forward_sequence.1} parent=5 // pred_check
        %p181 = pneg %p180
      $region18: #{spiking_neuron_forward_sequence.1} parent=5 // pred_check_branch
        %183 = sbr.rel (%p181) target = $region20
      $region19: #{spiking_neuron_forward_sequence.1} parent=5 // pred_region
        // Predicated region
        $region21: #{spiking_neuron_forward_sequence.1} parent=19 // pred_check
          %p184 = pneg %p72
        $region22: #{spiking_neuron_forward_sequence.1} parent=19 // pred_check_branch
          %186 = sbr.rel (%p184) target = $region24
        $region23: #{spiking_neuron_forward_sequence.1} parent=19 // pred_region
          %s187 = sand.u32 %s62, 1
          %s188 = sand.u32 %s62, 1
          %s189 = smul.addr %s188, 128
          %s190 = scalar_lea.vmem [#allocation2], %s189
          %s191 = smul.addr %s21, 8
          %s192 = scalar_lea.vmem %s1, %s191
          // Predicated region
          $region25: #{spiking_neuron_forward_sequence.1} parent=23 // pred_check
            _
          $region26: #{spiking_neuron_forward_sequence.1} parent=23 // pred_check_branch
            %194 = sbr.rel (0) target = $region28
          $region27: #{spiking_neuron_forward_sequence.1} parent=23 // pred_region
            // Predicated region
            $region29: #{spiking_neuron_forward_sequence.1} parent=27 // pred_check
              _
            $region30: #{spiking_neuron_forward_sequence.1} parent=27 // pred_check_branch
              %196 = sbr.rel (0) target = $region32
            $region31: #{spiking_neuron_forward_sequence.1} parent=27 // pred_region
              // Predicated region
              $region44: #{spiking_neuron_forward_sequence.1} parent=31 // pred_check
                _
              $region45: #{spiking_neuron_forward_sequence.1} parent=31 // pred_check_branch
                %241 = sbr.rel (0) target = $region47
              $region46: #{spiking_neuron_forward_sequence.1} parent=31 // pred_region
                loop: start=0, step=1, limit=1
                $region48: #{spiking_neuron_forward_sequence.1} parent=46 // loop_pre_header
                  _
                $region49: #{spiking_neuron_forward_sequence.1} parent=46 // loop_header
                  %s243 = sphi 0, %s247
                  %p244 = scmp.ge.s32.totalorder %s243, 1
                  %s248 = sphi %s192, %s192
                  %s249 = sphi %s190, %s190
                $region50: #{spiking_neuron_forward_sequence.1} parent=46 // loop_header_branch
                  %246 = sbr.rel (%p244) target = $region54
                $region51: #{spiking_neuron_forward_sequence.1} parent=46 // loop_body
                  %v250 = vld [vmem:[%s248] sm:$0xff]
                  %251 = vst [vmem:[%s249] sm:$0xff] %v250
                  %v252 = vld [vmem:[%s248 + $0x10] sm:$0xff]
                  %253 = vst [vmem:[%s249 + $0x8] sm:$0xff] %v252
                  %v254 = vld [vmem:[%s248 + $0x20] sm:$0xff]
                  %255 = vst [vmem:[%s249 + $0x10] sm:$0xff] %v254
                  %v256 = vld [vmem:[%s248 + $0x30] sm:$0xff]
                  %257 = vst [vmem:[%s249 + $0x18] sm:$0xff] %v256
                  %v258 = vld [vmem:[%s248 + $0x40] sm:$0xff]
                  %259 = vst [vmem:[%s249 + $0x20] sm:$0xff] %v258
                  %v260 = vld [vmem:[%s248 + $0x50] sm:$0xff]
                  %261 = vst [vmem:[%s249 + $0x28] sm:$0xff] %v260
                  %v262 = vld [vmem:[%s248 + $0x60] sm:$0xff]
                  %263 = vst [vmem:[%s249 + $0x30] sm:$0xff] %v262
                  %v264 = vld [vmem:[%s248 + $0x70] sm:$0xff]
                  %265 = vst [vmem:[%s249 + $0x38] sm:$0xff] %v264
                  %v266 = vld [vmem:[%s248 + $0x80] sm:$0xff]
                  %267 = vst [vmem:[%s249 + $0x40] sm:$0xff] %v266
                  %v268 = vld [vmem:[%s248 + $0x90] sm:$0xff]
                  %269 = vst [vmem:[%s249 + $0x48] sm:$0xff] %v268
                  %v270 = vld [vmem:[%s248 + $0xa0] sm:$0xff]
                  %271 = vst [vmem:[%s249 + $0x50] sm:$0xff] %v270
                  %v272 = vld [vmem:[%s248 + $0xb0] sm:$0xff]
                  %273 = vst [vmem:[%s249 + $0x58] sm:$0xff] %v272
                  %v274 = vld [vmem:[%s248 + $0xc0] sm:$0xff]
                  %275 = vst [vmem:[%s249 + $0x60] sm:$0xff] %v274
                  %v276 = vld [vmem:[%s248 + $0xd0] sm:$0xff]
                  %277 = vst [vmem:[%s249 + $0x68] sm:$0xff] %v276
                  %v278 = vld [vmem:[%s248 + $0xe0] sm:$0xff]
                  %279 = vst [vmem:[%s249 + $0x70] sm:$0xff] %v278
                  %v280 = vld [vmem:[%s248 + $0xf0] sm:$0xff]
                  %281 = vst [vmem:[%s249 + $0x78] sm:$0xff] %v280
                $region52: #{spiking_neuron_forward_sequence.1} parent=46 // loop_footer
                  %s247 = sadd.s32 1, %s243
                $region53: #{spiking_neuron_forward_sequence.1} parent=46 // loop_footer_branch
                  %242 = sbr.rel target = $region49
                $region54: #{spiking_neuron_forward_sequence.1} parent=46 // loop_exit
                  _
              $region47: #{spiking_neuron_forward_sequence.1} parent=31 // pred_fallthru
                _
              // Predicated region
              $region55: #{spiking_neuron_forward_sequence.1} parent=31 // pred_check
                _
              $region56: #{spiking_neuron_forward_sequence.1} parent=31 // pred_check_branch
                %283 = sbr.rel target = $region58
              $region57: #{spiking_neuron_forward_sequence.1} parent=31 // pred_region
                _
              $region58: #{spiking_neuron_forward_sequence.1} parent=31 // pred_fallthru
                _
            $region32: #{spiking_neuron_forward_sequence.1} parent=27 // pred_fallthru
              _
            // Predicated region
            $region33: #{spiking_neuron_forward_sequence.1} parent=27 // pred_check
              _
            $region34: #{spiking_neuron_forward_sequence.1} parent=27 // pred_check_branch
              %198 = sbr.rel target = $region36
            $region35: #{spiking_neuron_forward_sequence.1} parent=27 // pred_region
              loop: start=0, step=1, limit=1
              $region37: #{spiking_neuron_forward_sequence.1} parent=35 // loop_pre_header
                _
              $region38: #{spiking_neuron_forward_sequence.1} parent=35 // loop_header
                %s201 = sphi 0, %s205
                %p202 = scmp.ge.s32.totalorder %s201, 1
                %s206 = sphi %s192, %s192
                %s207 = sphi %s190, %s190
              $region39: #{spiking_neuron_forward_sequence.1} parent=35 // loop_header_branch
                %204 = sbr.rel (%p202) target = $region43
              $region40: #{spiking_neuron_forward_sequence.1} parent=35 // loop_body
                %v208 = vld [vmem:[%s206] sm:$0xff]
                %209 = vst [vmem:[%s207] sm:$0xff] %v208
                %v210 = vld [vmem:[%s206 + $0x10] sm:$0xff]
                %211 = vst [vmem:[%s207 + $0x8] sm:$0xff] %v210
                %v212 = vld [vmem:[%s206 + $0x20] sm:$0xff]
                %213 = vst [vmem:[%s207 + $0x10] sm:$0xff] %v212
                %v214 = vld [vmem:[%s206 + $0x30] sm:$0xff]
                %215 = vst [vmem:[%s207 + $0x18] sm:$0xff] %v214
                %v216 = vld [vmem:[%s206 + $0x40] sm:$0xff]
                %217 = vst [vmem:[%s207 + $0x20] sm:$0xff] %v216
                %v218 = vld [vmem:[%s206 + $0x50] sm:$0xff]
                %219 = vst [vmem:[%s207 + $0x28] sm:$0xff] %v218
                %v220 = vld [vmem:[%s206 + $0x60] sm:$0xff]
                %221 = vst [vmem:[%s207 + $0x30] sm:$0xff] %v220
                %v222 = vld [vmem:[%s206 + $0x70] sm:$0xff]
                %223 = vst [vmem:[%s207 + $0x38] sm:$0xff] %v222
                %v224 = vld [vmem:[%s206 + $0x80] sm:$0xff]
                %225 = vst [vmem:[%s207 + $0x40] sm:$0xff] %v224
                %v226 = vld [vmem:[%s206 + $0x90] sm:$0xff]
                %227 = vst [vmem:[%s207 + $0x48] sm:$0xff] %v226
                %v228 = vld [vmem:[%s206 + $0xa0] sm:$0xff]
                %229 = vst [vmem:[%s207 + $0x50] sm:$0xff] %v228
                %v230 = vld [vmem:[%s206 + $0xb0] sm:$0xff]
                %231 = vst [vmem:[%s207 + $0x58] sm:$0xff] %v230
                %v232 = vld [vmem:[%s206 + $0xc0] sm:$0xff]
                %233 = vst [vmem:[%s207 + $0x60] sm:$0xff] %v232
                %v234 = vld [vmem:[%s206 + $0xd0] sm:$0xff]
                %235 = vst [vmem:[%s207 + $0x68] sm:$0xff] %v234
                %v236 = vld [vmem:[%s206 + $0xe0] sm:$0xff]
                %237 = vst [vmem:[%s207 + $0x70] sm:$0xff] %v236
                %v238 = vld [vmem:[%s206 + $0xf0] sm:$0xff]
                %239 = vst [vmem:[%s207 + $0x78] sm:$0xff] %v238
              $region41: #{spiking_neuron_forward_sequence.1} parent=35 // loop_footer
                %s205 = sadd.s32 1, %s201
              $region42: #{spiking_neuron_forward_sequence.1} parent=35 // loop_footer_branch
                %200 = sbr.rel target = $region38
              $region43: #{spiking_neuron_forward_sequence.1} parent=35 // loop_exit
                _
            $region36: #{spiking_neuron_forward_sequence.1} parent=27 // pred_fallthru
              _
          $region28: #{spiking_neuron_forward_sequence.1} parent=23 // pred_fallthru
            _
          %284 = vnop
        $region24: #{spiking_neuron_forward_sequence.1} parent=19 // pred_fallthru
          _
        // Predicated region
        $region59: #{spiking_neuron_forward_sequence.1} parent=19 // pred_check
          %p285 = pneg %p98
        $region60: #{spiking_neuron_forward_sequence.1} parent=19 // pred_check_branch
          %287 = sbr.rel (%p285) target = $region62
        $region61: #{spiking_neuron_forward_sequence.1} parent=19 // pred_region
          %p288 = scmp.lt.s32.totalorder %s21, 1
          %s289 = scalar_select %p288, %s21, 1
          %s290 = scalar_lea.vmem %s2, %s289
        $region62: #{spiking_neuron_forward_sequence.1} parent=19 // pred_fallthru
          _
      $region20: #{spiking_neuron_forward_sequence.1} parent=5 // pred_fallthru
        _
      %p291 = scmp.le.s32.totalorder 1, %s14
      %p292 = scmp.lt.s32.totalorder %s14, 3
      %p293 = pnand %p291, %p292
      %p294 = pneg %p293
      // Predicated region
      $region63: #{spiking_neuron_forward_sequence.1} parent=5 // pred_check
        _
      $region64: #{spiking_neuron_forward_sequence.1} parent=5 // pred_check_branch
        %296 = sbr.rel (%p293) target = $region66
      $region65: #{spiking_neuron_forward_sequence.1} parent=5 // pred_region
        %s297 = ssub.s32 %s14, 1
        %s298 = sand.u32 %s65, 1
        %s299 = sand.u32 %s65, 1
        %s300 = smul.addr %s299, 128
        %s301 = scalar_lea.vmem [#allocation2], %s300
        // Predicated region
        $region67: #{spiking_neuron_forward_sequence.1} parent=65 // pred_check
          %p302 = pneg %p78
        $region68: #{spiking_neuron_forward_sequence.1} parent=65 // pred_check_branch
          %304 = sbr.rel (%p302) target = $region70
        $region69: #{spiking_neuron_forward_sequence.1} parent=65 // pred_region
          _
        $region70: #{spiking_neuron_forward_sequence.1} parent=65 // pred_fallthru
          _
        %p305 = scmp.lt.s32.totalorder %s24, 0
        %s306 = scalar_select %p305, %s24, 0
        %s307 = smul.addr %s306, 8
        %s308 = scalar_lea.vmem %s0, %s307
        %p309 = pneg %p52
        %p310 = pneg %p49
        %s311 = sand.u32 %s65, 1
        %s312 = sand.u32 %s65, 1
        %s313 = smul.addr %s312, 128
        %s314 = scalar_lea.vmem [#allocation2], %s313
        %p315 = pneg %p78
        %p316 = pneg %p75
        %p317 = scmp.lt.s32.totalorder %s23, 1
        %s318 = scalar_select %p317, %s23, 1
        %s319 = scalar_lea.vmem %s2, %s318
        %p320 = pneg %p104
        %p321 = pneg %p101
        %p322 = pneg %p132
        %p323 = pneg %p129
        %s324 = sand.u32 %s119, 1
        %s325 = scalar_lea.sflag [#allocation4], %s324
        %s326 = sand.u32 %s119, 1
        %s327 = smul.addr %s326, 8
        %s328 = scalar_lea.vmem [#allocation3], %s327
        %p329 = pneg %p158
        %p330 = pneg %p155
        %p331 = scmp.lt.s32.totalorder %s23, 1
        %s332 = scalar_select %p331, %s23, 1
        %s333 = scalar_lea.vmem %s4, %s332
        %p334 = scmp.lt.s32.totalorder %s24, 0
        %s335 = scalar_select %p334, %s24, 0
        %s336 = smul.addr %s335, 8
        %s337 = scalar_lea.vmem %s0, %s336
        %p338 = scmp.lt.s32.totalorder %s23, 1
        %s339 = scalar_select %p338, %s23, 1
        %s340 = scalar_lea.vmem %s2, %s339
        %p341 = scmp.lt.s32.totalorder %s23, 1
        %s342 = scalar_select %p341, %s23, 1
        %s343 = scalar_lea.vmem %s4, %s342
        %p344 = scmp.eq.s32.totalorder %s24, 0
        // Predicated region
        $region71: #{spiking_neuron_forward_sequence.1} parent=65 // pred_check
          %p345 = pneg %p344
        $region72: #{spiking_neuron_forward_sequence.1} parent=65 // pred_check_branch
          %347 = sbr.rel (%p345) target = $region74
        $region73: #{spiking_neuron_forward_sequence.1} parent=65 // pred_region
          %v348 = vld [vmem:[%s340] sm:$0x1]
          %349 = vst [vmem:[%s343] sm:$0x1] %v348
        $region74: #{spiking_neuron_forward_sequence.1} parent=65 // pred_fallthru
          _
        %v350 = vld [vmem:[%s337] sm:$0xff]
        %v351 = vld [vmem:[%s301] sm:$0xff]
        %v352 = vld [vmem:[%s301 + $0x8] sm:$0xff]
        %v353 = vld [vmem:[%s301 + $0x10] sm:$0xff]
        %v354 = vld [vmem:[%s301 + $0x18] sm:$0xff]
        %v355 = vld [vmem:[%s301 + $0x20] sm:$0xff]
        %v356 = vld [vmem:[%s301 + $0x28] sm:$0xff]
        %v357 = vld [vmem:[%s301 + $0x30] sm:$0xff]
        %v358 = vld [vmem:[%s301 + $0x38] sm:$0xff]
        %v359 = vld [vmem:[%s301 + $0x40] sm:$0xff]
        %v360 = vld [vmem:[%s301 + $0x48] sm:$0xff]
        %v361 = vld [vmem:[%s301 + $0x50] sm:$0xff]
        %v362 = vld [vmem:[%s301 + $0x58] sm:$0xff]
        %v363 = vld [vmem:[%s301 + $0x60] sm:$0xff]
        %v364 = vld [vmem:[%s301 + $0x68] sm:$0xff]
        %v365 = vld [vmem:[%s301 + $0x70] sm:$0xff]
        %v366 = vld [vmem:[%s301 + $0x78] sm:$0xff]
        %367 = vmatprep.subr.mxu0 0.0
        %368 = vmatpush1.msra.mxu0 %v351
        %369 = vmatprep.subr.mxu0 0.0
        %370 = vmatpush1.msra.mxu0 %v352
        %371 = vmatprep.subr.mxu0 0.0
        %372 = vmatpush1.msra.mxu0 %v353
        %373 = vmatprep.subr.mxu0 0.0
        %374 = vmatpush1.msra.mxu0 %v354
        %375 = vmatprep.subr.mxu0 0.0
        %376 = vmatpush1.msra.mxu0 %v355
        %377 = vmatprep.subr.mxu0 0.0
        %378 = vmatpush1.msra.mxu0 %v356
        %379 = vmatprep.subr.mxu0 0.0
        %380 = vmatpush1.msra.mxu0 %v357
        %381 = vmatprep.subr.mxu0 0.0
        %382 = vmatpush1.msra.mxu0 %v358
        %383 = vmatprep.subr.mxu0 0.0
        %384 = vmatpush1.msra.mxu0 %v359
        %385 = vmatprep.subr.mxu0 0.0
        %386 = vmatpush1.msra.mxu0 %v360
        %387 = vmatprep.subr.mxu0 0.0
        %388 = vmatpush1.msra.mxu0 %v361
        %389 = vmatprep.subr.mxu0 0.0
        %390 = vmatpush1.msra.mxu0 %v362
        %391 = vmatprep.subr.mxu0 0.0
        %392 = vmatpush1.msra.mxu0 %v363
        %393 = vmatprep.subr.mxu0 0.0
        %394 = vmatpush1.msra.mxu0 %v364
        %395 = vmatprep.subr.mxu0 0.0
        %396 = vmatpush1.msra.mxu0 %v365
        %397 = vmatprep.subr.mxu0 0.0
        %398 = vmatpush1.msra.mxu0 %v366
        %399 = vmatprep.subr.mxu0 0.0
        %400 = vmatpush1.msra.mxu0 0.0
        %401 = vmatprep.subr.mxu0 0.0
        %402 = vmatpush1.msra.mxu0 0.0
        %403 = vmatprep.subr.mxu0 0.0
        %404 = vmatpush1.msra.mxu0 0.0
        %405 = vmatprep.subr.mxu0 0.0
        %406 = vmatpush1.msra.mxu0 0.0
        %407 = vmatprep.subr.mxu0 0.0
        %408 = vmatpush1.msra.mxu0 0.0
        %409 = vmatprep.subr.mxu0 0.0
        %410 = vmatpush1.msra.mxu0 0.0
        %411 = vmatprep.subr.mxu0 0.0
        %412 = vmatpush1.msra.mxu0 0.0
        %413 = vmatprep.subr.mxu0 0.0
        %414 = vmatpush1.msra.mxu0 0.0
        %415 = vmatprep.subr.mxu0 0.0
        %416 = vmatpush1.msra.mxu0 0.0
        %417 = vmatprep.subr.mxu0 0.0
        %418 = vmatpush1.msra.mxu0 0.0
        %419 = vmatprep.subr.mxu0 0.0
        %420 = vmatpush1.msra.mxu0 0.0
        %421 = vmatprep.subr.mxu0 0.0
        %422 = vmatpush1.msra.mxu0 0.0
        %423 = vmatprep.subr.mxu0 0.0
        %424 = vmatpush1.msra.mxu0 0.0
        %425 = vmatprep.subr.mxu0 0.0
        %426 = vmatpush1.msra.mxu0 0.0
        %427 = vmatprep.subr.mxu0 0.0
        %428 = vmatpush1.msra.mxu0 0.0
        %429 = vmatprep.subr.mxu0 0.0
        %430 = vmatpush1.msra.mxu0 0.0
        %431 = vmatprep.mubr.f32.mxu0 0.0
        %432 = vmatmul.mubr.f32.gmra.mrb[0].mxu0 %v350
        %v433 = vpop.f32.mrb[0].mxu0
        %v434 = vadd.f32 0.0, %v433
        %v435 = vpop.f32.mrb[0].mxu0
        %436 = vdwg.mxu0
        %437 = vst [vmem:[%s328] sm:$0xff] %v434
        %v438 = vld [vmem:[%s343] sm:$0x1]
        %v439 = vld [vmem:[%s328] sm:$0xff]
        %v440 = vmul.f32 %v438, 0.9048374
        %v441 = vadd.f32 %v440, %v439
        %vm442 = vcmp.ge.f32.partialorder %v441, 1.0
        %v443 = vsel %vm442, 1, 0
        %v444 = vcvt.s32.f32 %v443
        %v445 = vsel %vm442, 0.0, %v441
        %v446 = vmul.f32 %v445, 0.9048374
        %v449 = vunpack.c.l.s4 1966171168
        %v450 = vunpack.c.0.s8 %v449
        %v451 = vlaneseq
        %v452 = vshrl.u32 %v451, 7
        %v453 = vsub.s32 %v450, %v452
        %v454 = vrot.slane %v439, %v453
        %v455 = vcombine.high %v454, %v454
        %v457 = vunpack.c.l.s4 1966171168
        %v458 = vunpack.c.0.s8 %v457
        %v459 = vlaneseq
        %v460 = vshrl.u32 %v459, 7
        %v461 = vsub.s32 %v458, %v460
        %v462 = vrot.slane %v454, %v461
        %v464 = vunpack.c.l.s4 1966171168
        %v465 = vunpack.c.0.s8 %v464
        %v466 = vlaneseq
        %v467 = vshrl.u32 %v466, 7
        %v468 = vsub.s32 %v465, %v467
        %v469 = vrot.slane %v455, %v468
        %v471 = vadd.f32 %v446, %v469
        %vm472 = vcmp.ge.f32.partialorder %v471, 1.0
        %v473 = vsel %vm472, 1, 0
        %v474 = vcvt.s32.f32 %v473
        %v475 = vsel %vm472, 0.0, %v471
        %v476 = vmul.f32 %v475, 0.9048374
        %v477 = vcombine.high %v462, %v462
        %v479 = vadd.f32 %v476, %v477
        %vm480 = vcmp.ge.f32.partialorder %v479, 1.0
        %v481 = vsel %vm480, 1, 0
        %v482 = vcvt.s32.f32 %v481
        %v483 = vsel %vm480, 0.0, %v479
        %v484 = vmul.f32 %v483, 0.9048374
        %v485 = vcombine.high %v469, %v469
        %v487 = vadd.f32 %v484, %v485
        %vm488 = vcmp.ge.f32.partialorder %v487, 1.0
        %v489 = vsel %vm488, 1, 0
        %v490 = vcvt.s32.f32 %v489
        %v491 = vsel %vm488, 0.0, %v487
        %v492 = vmul.f32 %v491, 0.9048374
        %v493 = vcombine.high %v439, %v439
        %v495 = vunpack.c.l.s4 1966171168
        %v496 = vunpack.c.0.s8 %v495
        %v497 = vlaneseq
        %v498 = vshrl.u32 %v497, 7
        %v499 = vsub.s32 %v496, %v498
        %v500 = vrot.slane %v493, %v499
        %v502 = vunpack.c.l.s4 1966171168
        %v503 = vunpack.c.0.s8 %v502
        %v504 = vlaneseq
        %v505 = vshrl.u32 %v504, 7
        %v506 = vsub.s32 %v503, %v505
        %v507 = vrot.slane %v500, %v506
        %v509 = vadd.f32 %v492, %v507
        %vm510 = vcmp.ge.f32.partialorder %v509, 1.0
        %v511 = vsel %vm510, 1, 0
        %v512 = vcvt.s32.f32 %v511
        %v513 = vsel %vm510, 0.0, %v509
        %v514 = vmul.f32 %v513, 0.9048374
        %v515 = vcombine.high %v500, %v500
        %v517 = vunpack.c.l.s4 1966171168
        %v518 = vunpack.c.0.s8 %v517
        %v519 = vlaneseq
        %v520 = vshrl.u32 %v519, 7
        %v521 = vsub.s32 %v518, %v520
        %v522 = vrot.slane %v515, %v521
        %v524 = vadd.f32 %v514, %v522
        %vm525 = vcmp.ge.f32.partialorder %v524, 1.0
        %v526 = vsel %vm525, 1, 0
        %v527 = vcvt.s32.f32 %v526
        %v528 = vsel %vm525, 0.0, %v524
        %v529 = vmul.f32 %v528, 0.9048374
        %v530 = vcombine.high %v507, %v507
        %v532 = vadd.f32 %v529, %v530
        %vm533 = vcmp.ge.f32.partialorder %v532, 1.0
        %v534 = vsel %vm533, 1, 0
        %v535 = vcvt.s32.f32 %v534
        %v536 = vsel %vm533, 0.0, %v532
        %v537 = vmul.f32 %v536, 0.9048374
        %v538 = vcombine.high %v522, %v522
        %v540 = vadd.f32 %v537, %v538
        %vm541 = vcmp.ge.f32.partialorder %v540, 1.0
        %v542 = vsel %vm541, 1, 0
        %v543 = vcvt.s32.f32 %v542
        %v544 = vsel %vm541, 0.0, %v540
        %v546 = vlaneseq
        %v547 = vshrl.u32 %v546, 7
        %v548 = vsub.s32 0, %v547
        %v549 = vrot.slane %v474, %v548
        %v552 = vlaneseq
        %v553 = vshrl.u32 %v552, 7
        %v554 = vsub.s32 0, %v553
        %v555 = vrot.slane %v482, %v554
        %v558 = vlaneseq
        %v559 = vshrl.u32 %v558, 7
        %v560 = vsub.s32 0, %v559
        %v561 = vrot.slane %v490, %v560
        %v564 = vlaneseq
        %v565 = vshrl.u32 %v564, 7
        %v566 = vsub.s32 0, %v565
        %v567 = vrot.slane %v512, %v566
        %v570 = vlaneseq
        %v571 = vshrl.u32 %v570, 7
        %v572 = vsub.s32 0, %v571
        %v573 = vrot.slane %v527, %v572
        %v576 = vlaneseq
        %v577 = vshrl.u32 %v576, 7
        %v578 = vsub.s32 0, %v577
        %v579 = vrot.slane %v535, %v578
        %v582 = vlaneseq
        %v583 = vshrl.u32 %v582, 7
        %v584 = vsub.s32 0, %v583
        %v585 = vrot.slane %v543, %v584
        %vm587 = vcmask 1040384
        %v588 = vsel %vm587, %v444, %v549
        %vm589 = vcmask 1041408
        %v590 = vsel %vm589, %v588, %v555
        %vm591 = vcmask 1042432
        %v592 = vsel %vm591, %v590, %v561
        %vm593 = vcmask 1043456
        %v594 = vsel %vm593, %v592, %v567
        %vm595 = vcmask 1044480
        %v596 = vsel %vm595, %v594, %v573
        %vm597 = vcmask 1045504
        %v598 = vsel %vm597, %v596, %v579
        %vm599 = vcmask 1046528
        %v600 = vsel %vm599, %v598, %v585
        %601 = vst [vmem:[%s328] sm:$0xff] %v600
        %602 = vst [vmem:[%s343] sm:$0x1] %v544
        %s603 = sand.u32 %s119, 1
        %s604 = scalar_lea.sflag [#allocation4], %s603
        %s605 = sand.u32 %s119, 1
        %s606 = smul.addr %s605, 8
        %s607 = scalar_lea.vmem [#allocation3], %s606
        %p608 = scmp.lt.s32.totalorder %s23, 1
        %s609 = scalar_select %p608, %s23, 1
        %s610 = scalar_lea.vmem %s4, %s609
        // Predicated region
        $region75: #{spiking_neuron_forward_sequence.1} parent=65 // pred_check
          %p611 = pneg %p129
        $region76: #{spiking_neuron_forward_sequence.1} parent=65 // pred_check_branch
          %613 = sbr.rel (%p611) target = $region78
        $region77: #{spiking_neuron_forward_sequence.1} parent=65 // pred_region
          %s615 = ssub.s32 128, 128
          %616 = vsyncadd %s604, %s615
          %s617 = smul.addr %s24, 2
          %s618 = sadd.s32 %s23, %s617
          %s619 = smul.addr %s618, 128
          %s620 = scalar_lea.hbm %s3, %s619
          %s622 = sshll.u32 %s607, 4
          %s623 = int_to_ptr.vmem [resolvable:$true] %s622
          %625 = dma.vmem_to_hbm [thread:$0]  %s623, 128, %s620, %s604
        $region78: #{spiking_neuron_forward_sequence.1} parent=65 // pred_fallthru
          _
        // Predicated region
        $region79: #{spiking_neuron_forward_sequence.1} parent=65 // pred_check
          %p626 = pneg %p155
        $region80: #{spiking_neuron_forward_sequence.1} parent=65 // pred_check_branch
          %628 = sbr.rel (%p626) target = $region82
        $region81: #{spiking_neuron_forward_sequence.1} parent=65 // pred_region
          _
        $region82: #{spiking_neuron_forward_sequence.1} parent=65 // pred_fallthru
          _
      $region66: #{spiking_neuron_forward_sequence.1} parent=5 // pred_fallthru
        _
      %p629 = scmp.le.s32.totalorder 2, %s14
      // Predicated region
      $region83: #{spiking_neuron_forward_sequence.1} parent=5 // pred_check
        %p630 = pneg %p629
      $region84: #{spiking_neuron_forward_sequence.1} parent=5 // pred_check_branch
        %632 = sbr.rel (%p630) target = $region86
      $region85: #{spiking_neuron_forward_sequence.1} parent=5 // pred_region
        %s633 = ssub.s32 %s14, 2
        // Predicated region
        $region87: #{spiking_neuron_forward_sequence.1} parent=85 // pred_check
          %p634 = pneg %p135
        $region88: #{spiking_neuron_forward_sequence.1} parent=85 // pred_check_branch
          %636 = sbr.rel (%p634) target = $region90
        $region89: #{spiking_neuron_forward_sequence.1} parent=85 // pred_region
          %s637 = sand.u32 %s120, 1
          %s638 = scalar_lea.sflag [#allocation4], %s637
          %s639 = sand.u32 %s120, 1
          %s640 = smul.addr %s639, 8
          %s641 = scalar_lea.vmem [#allocation3], %s640
          %642 = dma.done %s638, 128
        $region90: #{spiking_neuron_forward_sequence.1} parent=85 // pred_fallthru
          _
        // Predicated region
        $region91: #{spiking_neuron_forward_sequence.1} parent=85 // pred_check
          %p643 = pneg %p161
        $region92: #{spiking_neuron_forward_sequence.1} parent=85 // pred_check_branch
          %645 = sbr.rel (%p643) target = $region94
        $region93: #{spiking_neuron_forward_sequence.1} parent=85 // pred_region
          %p646 = scmp.lt.s32.totalorder %s25, 1
          %s647 = scalar_select %p646, %s25, 1
          %s648 = scalar_lea.vmem %s4, %s647
        $region94: #{spiking_neuron_forward_sequence.1} parent=85 // pred_fallthru
          _
      $region86: #{spiking_neuron_forward_sequence.1} parent=5 // pred_fallthru
        _
    $region6: #{spiking_neuron_forward_sequence.1} parent=1 // loop_footer
      %s18 = sadd.s32 1, %s14
    $region7: #{spiking_neuron_forward_sequence.1} parent=1 // loop_footer_branch
      %13 = sbr.rel target = $region3
    $region8: #{spiking_neuron_forward_sequence.1} parent=1 // loop_exit
      _
    %649 = vsyncpa [#allocation4], 1
    %s650 = scalar_lea.sflag [#allocation4], 1
    %651 = vsyncpa %s650, 1

</llo_original>
